<compile_context>
chip_gen: v6e
topology: v6e:2x2x1
jax: 0.10.0
libtpu: 0.0.40
codegen_flags: <defaults>
</compile_context>

<pallas_src>
import functools

import jax
import jax.numpy as jnp
from jax.experimental import pallas as pl
from jax.experimental.pallas import tpu as pltpu

_CP = pltpu.CompilerParams(dimension_semantics=("arbitrary",))


def _full_spec(shape):
    nd = len(shape)
    return pl.BlockSpec(shape, lambda i, _nd=nd: (0,) * _nd)


# --------------------------------------------------------------------------- #
# Pallas kernel: Conv1d + folded-BN affine + optional ReLU, fully fused
# --------------------------------------------------------------------------- #
def bn_conv1d_kernel(x_ref, w_ref, scale_ref, shift_ref, o_ref, *,
                     kernel_size, stride, padding, dilation, apply_relu):
    """x_ref:(B,Cin,Lin)  w_ref:(Cout,K*Cin)  scale/shift:(Cout,1)  o_ref:(B,Cout,Lout)."""
    batch, cin, _ = x_ref.shape
    lout = o_ref.shape[2]

    x = x_ref[...]
    if padding > 0:  # zero-pad inside VMEM (no wrapper-side pad / HBM copy)
        zpad = jnp.zeros((batch, cin, padding), jnp.float32)
        x = jnp.concatenate([zpad, x, zpad], axis=2)

    # Number of stride-1 output positions.
    lfull = x.shape[2] - dilation * (kernel_size - 1)

    # Build the im2col block (K*Cin, B*lfull): tap-k rows are dilation-shifted
    # lane slices stacked along sublanes; batches are concatenated along lanes so
    # a SINGLE MXU matmul covers every tap and the whole batch.
    per_batch = []
    for b in range(batch):                                   # B is small; unrolled
        xb = x[b]                                            # (Cin, Lpad)
        taps = [xb[:, k * dilation:k * dilation + lfull] for k in range(kernel_size)]
        per_batch.append(jnp.concatenate(taps, axis=0))      # (K*Cin, lfull)
    patches = per_batch[0] if batch == 1 else jnp.concatenate(per_batch, axis=1)

    # One matmul: (Cout, K*Cin) @ (K*Cin, B*lfull), f32 accumulation.
    y = jnp.dot(w_ref[...], patches, preferred_element_type=jnp.float32)

    scale = scale_ref[...]                                   # (Cout, 1)
    shift = shift_ref[...]

    if stride > 1:
        # Exact decimation of the stride-1 positions via a 0/1 selection matmul
        # (avoids strided lane slicing inside the kernel); built once, reused
        # for every batch.
        row = jax.lax.broadcasted_iota(jnp.int32, (lfull, lout), 0)
        col = jax.lax.broadcasted_iota(jnp.int32, (lfull, lout), 1)
        dec = (row == col * stride).astype(jnp.float32)      # (lfull, lout)
        for b in range(batch):
            yb = jnp.dot(y[:, b * lfull:(b + 1) * lfull], dec,
                         preferred_element_type=jnp.float32)  # (Cout, lout)
            yb = yb * scale + shift                          # folded BN (+ bias)
            if apply_relu:
                yb = jnp.maximum(yb, 0.0)
            o_ref[b, :, :] = yb
    else:
        # stride == 1: lfull == lout, single epilogue over the whole block.
        y = y * scale + shift
        if apply_relu:
            y = jnp.maximum(y, 0.0)
        for b in range(batch):
            o_ref[b, :, :] = y[:, b * lfull:(b + 1) * lfull]


# --------------------------------------------------------------------------- #
# Wrapper: parameter folding + pallas_call
# --------------------------------------------------------------------------- #
def bn_conv1d(params, x, *, stride, padding, dilation=1, groups=1,
              activation=True, eps=1e-5):
    batch, cin, lin = x.shape
    w = params['w']                                          # (Cout, Cin//groups, K)
    cout, cin_g, ksize = w.shape
    lout = (lin + 2 * padding - dilation * (ksize - 1) - 1) // stride + 1
    lfull = lin + 2 * padding - dilation * (ksize - 1)

    # Block-diagonal (Cout, K*Cin) weight matching the kernel's im2col row order
    # (row index = k*Cin + c).  groups > 1 becomes zeros outside each block, so
    # the kernel still issues exactly one dense matmul.
    cout_g = cout // groups
    w_full = jnp.zeros((cout, ksize, cin), jnp.float32)
    for g in range(groups):
        blk = jnp.transpose(w[g * cout_g:(g + 1) * cout_g], (0, 2, 1))  # (cout_g,K,cin_g)
        w_full = w_full.at[g * cout_g:(g + 1) * cout_g, :,
                           g * cin_g:(g + 1) * cin_g].set(blk)
    w2d = w_full.reshape(cout, ksize * cin)

    # Fold BatchNorm1d (eval mode) and optional conv bias into scale/shift.
    scale = params['gamma'] * jax.lax.rsqrt(params['var'] + eps)
    shift = params['beta'] - params['mean'] * scale
    if params['b'] is not None:
        shift = shift + scale * params['b']

    flops = 2 * cout * (ksize * cin) * batch * lfull
    if stride > 1:
        flops += 2 * cout * lfull * lout * batch
    bytes_accessed = 4 * (batch * cin * lin + cout * ksize * cin + 2 * cout
                          + batch * cout * lout)

    kern = functools.partial(bn_conv1d_kernel, kernel_size=ksize, stride=stride,
                             padding=padding, dilation=dilation,
                             apply_relu=activation)
    return pl.pallas_call(
        kern,
        out_shape=jax.ShapeDtypeStruct((batch, cout, lout), jnp.float32),
        grid=(1,),
        in_specs=[_full_spec(x.shape), _full_spec((cout, ksize * cin)),
                  _full_spec((cout, 1)), _full_spec((cout, 1))],
        out_specs=_full_spec((batch, cout, lout)),
        compiler_params=_CP,
        cost_estimate=pl.CostEstimate(flops=flops, transcendentals=0,
                                      bytes_accessed=bytes_accessed),
    )(x, w2d, scale.reshape(cout, 1), shift.reshape(cout, 1))


# --------------------------------------------------------------------------- #
# Deterministic parameter init (PyTorch-like) and pure-JAX reference
# --------------------------------------------------------------------------- #
def init_bn_conv1d(key, in_channels, out_channels, kernel_size, *, groups=1, bias=False):
    kw, kb, kg, kbt, km, kv = jax.random.split(key, 6)
    cin_g = in_channels // groups
    bound = 1.0 / jnp.sqrt(jnp.float32(cin_g * kernel_size))
    p = {'w': jax.random.uniform(kw, (out_channels, cin_g, kernel_size),
                                 jnp.float32, -bound, bound)}
    p['b'] = (jax.random.uniform(kb, (out_channels,), jnp.float32, -bound, bound)
              if bias else None)
    p['gamma'] = 1.0 + 0.1 * jax.random.normal(kg, (out_channels,), jnp.float32)
    p['beta'] = 0.1 * jax.random.normal(kbt, (out_channels,), jnp.float32)
    p['mean'] = 0.1 * jax.random.normal(km, (out_channels,), jnp.float32)
    p['var'] = 0.5 + jax.random.uniform(kv, (out_channels,), jnp.float32)
    return p


def bn_conv1d_reference(params, x, *, stride, padding, dilation=1, groups=1,
                        activation=True, eps=1e-5):
    y = jax.lax.conv_general_dilated(
        x, params['w'], window_strides=(stride,), padding=[(padding, padding)],
        rhs_dilation=(dilation,), dimension_numbers=('NCH', 'OIH', 'NCH'),
        feature_group_count=groups, precision=jax.lax.Precision.HIGHEST)
    if params['b'] is not None:
        y = y + params['b'][None, :, None]
    scale = params['gamma'] * jax.lax.rsqrt(params['var'] + eps)
    y = (y - params['mean'][None, :, None]) * scale[None, :, None] \
        + params['beta'][None, :, None]
    if activation:
        y = jnp.maximum(y, 0.0)
    return y


# --------------------------------------------------------------------------- #
if __name__ == "__main__":
    key = jax.random.PRNGKey(0)
    kp_a, kp_b, kx = jax.random.split(key, 3)

    batch, cin, length = 2, 4, 128
    x = jax.random.normal(kx, (batch, cin, length), dtype=jnp.float32)

    # Config A: BN_Conv1d defaults (bias=False, activation=True), stride 1, pad 1.
    cfg_a = dict(stride=1, padding=1, dilation=1, groups=1, activation=True)
    p_a = init_bn_conv1d(kp_a, cin, 8, 3, groups=1, bias=False)
    run_a = jax.jit(functools.partial(bn_conv1d, **cfg_a))
    out_a = run_a(p_a, x)

    # Config B: strided, dilated, grouped conv with bias and no activation.
    cfg_b = dict(stride=2, padding=2, dilation=2, groups=2, activation=False)
    p_b = init_bn_conv1d(kp_b, cin, 8, 3, groups=2, bias=True)
    run_b = jax.jit(functools.partial(bn_conv1d, **cfg_b))
    out_b = run_b(p_b, x)

    jax.block_until_ready((out_a, out_b))

    ref_a = bn_conv1d_reference(p_a, x, **cfg_a)
    ref_b = bn_conv1d_reference(p_b, x, **cfg_b)

    assert out_a.shape == (batch, 8, 128) and out_b.shape == (batch, 8, 64)
    assert bool(jnp.all(jnp.isfinite(out_a))) and bool(jnp.all(jnp.isfinite(out_b)))
    assert float(jnp.max(jnp.abs(out_a - ref_a))) < 5e-2
    assert float(jnp.max(jnp.abs(out_b - ref_b))) < 5e-2
    print("KERNEL_OK")
</pallas_src>

<mosaic_0001>
module attributes {stable_mosaic.version = 11 : i64} {
  func.func @bn_conv1d_kernel(%arg0: i32, %arg1: memref<2x4x128xf32, #tpu.memory_space<vmem>>, %arg2: memref<8x12xf32, #tpu.memory_space<vmem>>, %arg3: memref<8x1xf32, #tpu.memory_space<vmem>>, %arg4: memref<8x1xf32, #tpu.memory_space<vmem>>, %arg5: memref<2x8x128xf32, #tpu.memory_space<vmem>>) attributes {dimension_semantics = [#tpu.dimension_semantics<arbitrary>], iteration_bounds = array<i64: 1>, scalar_prefetch = 0 : i64, scratch_operands = 0 : i64, tpu.core_type = #tpu.core_type<tc>, window_params = [{pipeline_mode = #tpu.pipeline_mode<synchronous>, transform_indices = @transform_0, window_bounds = array<i64: 2, 4, 128>}, {pipeline_mode = #tpu.pipeline_mode<synchronous>, transform_indices = @transform_1, window_bounds = array<i64: 8, 12>}, {pipeline_mode = #tpu.pipeline_mode<synchronous>, transform_indices = @transform_2, window_bounds = array<i64: 8, 1>}, {pipeline_mode = #tpu.pipeline_mode<synchronous>, transform_indices = @transform_3, window_bounds = array<i64: 8, 1>}, {pipeline_mode = #tpu.pipeline_mode<synchronous>, transform_indices = @transform_4, window_bounds = array<i64: 2, 8, 128>}]} {
    %c0 = arith.constant 0 : index
    %c0_0 = arith.constant 0 : index
    %c0_1 = arith.constant 0 : index
    %0 = vector.load %arg1[%c0, %c0_0, %c0_1] : memref<2x4x128xf32, #tpu.memory_space<vmem>>, vector<2x4x128xf32>
    %cst = arith.constant 0.000000e+00 : f32
    %1 = vector.broadcast %cst : f32 to vector<2x4x1xf32>
    %2 = tpu.concatenate %1, %0, %1 in 2 : vector<2x4x1xf32>, vector<2x4x128xf32>, vector<2x4x1xf32> -> vector<2x4x130xf32>
    %3 = vector.extract_strided_slice %2 {offsets = [0, 0, 0], sizes = [1, 4, 130], strides = [1, 1, 1]} : vector<2x4x130xf32> to vector<1x4x130xf32>
    %4 = vector.shape_cast %3 : vector<1x4x130xf32> to vector<4x130xf32>
    %5 = vector.extract_strided_slice %4 {offsets = [0, 0], sizes = [4, 128], strides = [1, 1]} : vector<4x130xf32> to vector<4x128xf32>
    %6 = vector.extract_strided_slice %4 {offsets = [0, 1], sizes = [4, 128], strides = [1, 1]} : vector<4x130xf32> to vector<4x128xf32>
    %7 = vector.extract_strided_slice %4 {offsets = [0, 2], sizes = [4, 128], strides = [1, 1]} : vector<4x130xf32> to vector<4x128xf32>
    %8 = tpu.concatenate %5, %6, %7 in 0 : vector<4x128xf32>, vector<4x128xf32>, vector<4x128xf32> -> vector<12x128xf32>
    %9 = vector.extract_strided_slice %2 {offsets = [1, 0, 0], sizes = [1, 4, 130], strides = [1, 1, 1]} : vector<2x4x130xf32> to vector<1x4x130xf32>
    %10 = vector.shape_cast %9 : vector<1x4x130xf32> to vector<4x130xf32>
    %11 = vector.extract_strided_slice %10 {offsets = [0, 0], sizes = [4, 128], strides = [1, 1]} : vector<4x130xf32> to vector<4x128xf32>
    %12 = vector.extract_strided_slice %10 {offsets = [0, 1], sizes = [4, 128], strides = [1, 1]} : vector<4x130xf32> to vector<4x128xf32>
    %13 = vector.extract_strided_slice %10 {offsets = [0, 2], sizes = [4, 128], strides = [1, 1]} : vector<4x130xf32> to vector<4x128xf32>
    %14 = tpu.concatenate %11, %12, %13 in 0 : vector<4x128xf32>, vector<4x128xf32>, vector<4x128xf32> -> vector<12x128xf32>
    %15 = tpu.concatenate %8, %14 in 1 : vector<12x128xf32>, vector<12x128xf32> -> vector<12x256xf32>
    %c0_2 = arith.constant 0 : index
    %c0_3 = arith.constant 0 : index
    %16 = vector.load %arg2[%c0_2, %c0_3] : memref<8x12xf32, #tpu.memory_space<vmem>>, vector<8x12xf32>
    %cst_4 = arith.constant dense<0.000000e+00> : vector<8x256xf32>
    %17 = tpu.matmul %16, %15, %cst_4 {dimension_numbers = #tpu.dot_dimension_numbers<[1], [0], [0], [1], [0, 0, 1, 1], [], []>} : vector<8x12xf32>, vector<12x256xf32>, vector<8x256xf32> -> vector<8x256xf32>
    %c0_5 = arith.constant 0 : index
    %c0_6 = arith.constant 0 : index
    %18 = vector.load %arg3[%c0_5, %c0_6] : memref<8x1xf32, #tpu.memory_space<vmem>>, vector<8x1xf32>
    %c0_7 = arith.constant 0 : index
    %c0_8 = arith.constant 0 : index
    %19 = vector.load %arg4[%c0_7, %c0_8] : memref<8x1xf32, #tpu.memory_space<vmem>>, vector<8x1xf32>
    %20 = vector.broadcast %18 : vector<8x1xf32> to vector<8x256xf32>
    %21 = arith.mulf %17, %20 : vector<8x256xf32>
    %22 = vector.broadcast %19 : vector<8x1xf32> to vector<8x256xf32>
    %23 = arith.addf %21, %22 : vector<8x256xf32>
    %cst_9 = arith.constant 0.000000e+00 : f32
    %24 = vector.broadcast %cst_9 : f32 to vector<8x256xf32>
    %25 = arith.maximumf %23, %24 : vector<8x256xf32>
    %26 = vector.extract_strided_slice %25 {offsets = [0, 0], sizes = [8, 128], strides = [1, 1]} : vector<8x256xf32> to vector<8x128xf32>
    %c0_10 = arith.constant 0 : index
    %c0_11 = arith.constant 0 : index
    %c0_12 = arith.constant 0 : index
    %27 = vector.load %arg5[%c0_10, %c0_11, %c0_12] : memref<2x8x128xf32, #tpu.memory_space<vmem>>, vector<1x8x128xf32>
    %28 = vector.shape_cast %27 : vector<1x8x128xf32> to vector<8x128xf32>
    %29 = vector.shape_cast %26 : vector<8x128xf32> to vector<1x8x128xf32>
    tpu.vector_store %arg5[%c0_10, %c0_11, %c0_12], %29 {strides = array<i32>} : memref<2x8x128xf32, #tpu.memory_space<vmem>>, vector<1x8x128xf32>,
    %30 = vector.extract_strided_slice %25 {offsets = [0, 128], sizes = [8, 128], strides = [1, 1]} : vector<8x256xf32> to vector<8x128xf32>
    %c1 = arith.constant 1 : index
    %c0_13 = arith.constant 0 : index
    %c0_14 = arith.constant 0 : index
    %31 = vector.load %arg5[%c1, %c0_13, %c0_14] : memref<2x8x128xf32, #tpu.memory_space<vmem>>, vector<1x8x128xf32>
    %32 = vector.shape_cast %31 : vector<1x8x128xf32> to vector<8x128xf32>
    %33 = vector.shape_cast %30 : vector<8x128xf32> to vector<1x8x128xf32>
    tpu.vector_store %arg5[%c1, %c0_13, %c0_14], %33 {strides = array<i32>} : memref<2x8x128xf32, #tpu.memory_space<vmem>>, vector<1x8x128xf32>,
    return
  }
  func.func @transform_0(%arg0: i32) -> (i32, i32, i32) {
    %c0_i32 = arith.constant 0 : i32
    %c0_i32_0 = arith.constant 0 : i32
    %c0_i32_1 = arith.constant 0 : i32
    %c0_i32_2 = arith.constant 0 : i32
    return %c0_i32, %c0_i32_0, %c0_i32_1 : i32, i32, i32
  }
  func.func @transform_1(%arg0: i32) -> (i32, i32) {
    %c0_i32 = arith.constant 0 : i32
    %c0_i32_0 = arith.constant 0 : i32
    %c0_i32_1 = arith.constant 0 : i32
    return %c0_i32, %c0_i32_0 : i32, i32
  }
  func.func @transform_2(%arg0: i32) -> (i32, i32) {
    %c0_i32 = arith.constant 0 : i32
    %c0_i32_0 = arith.constant 0 : i32
    %c0_i32_1 = arith.constant 0 : i32
    return %c0_i32, %c0_i32_0 : i32, i32
  }
  func.func @transform_3(%arg0: i32) -> (i32, i32) {
    %c0_i32 = arith.constant 0 : i32
    %c0_i32_0 = arith.constant 0 : i32
    %c0_i32_1 = arith.constant 0 : i32
    return %c0_i32, %c0_i32_0 : i32, i32
  }
  func.func @transform_4(%arg0: i32) -> (i32, i32, i32) {
    %c0_i32 = arith.constant 0 : i32
    %c0_i32_0 = arith.constant 0 : i32
    %c0_i32_1 = arith.constant 0 : i32
    %c0_i32_2 = arith.constant 0 : i32
    return %c0_i32, %c0_i32_0, %c0_i32_1 : i32, i32, i32
  }
}

</mosaic_0001>

<llo_original>
// kernel: bn_conv1d.1
$region0: #{bn_conv1d.1}
  #allocation0 [shape = 'u32[]', space=smem, size = 0x4, offset = 0x4, fixed_abs, tag = 'smem constant byte address 0x4 - core index']
  #allocation1 [shape = 'u32[144,128]{1,0:T(1,128)}', space=vmem, size = 0x12000, scoped, tag = 'internal scratch']
  %s0 = inlined_call_operand.vmem [shape: f32[2,4,128], index: 0, kind: input, shape index: {}]
  %s1 = inlined_call_operand.vmem [shape: f32[8,12], index: 1, kind: input, shape index: {}]
  %s2 = inlined_call_operand.vmem [shape: f32[8,1], index: 2, kind: input, shape index: {}]
  %s3 = inlined_call_operand.vmem [shape: f32[8,1], index: 3, kind: input, shape index: {}]
  %s4 = inlined_call_operand.hbm [shape: f32[2,8,128], index: 4, kind: output, shape index: {}]
  %s5 = sld [smem:[#allocation0]]
  $region26: #{bn_conv1d.1} parent=0
    _
  %s7 = ssub.s32 1, %s5
  %s8 = scalar_select 0, %s7, %s5
  $region1: #{bn_conv1d.1} parent=0
    #allocation2 [shape = 'u8[8192]{0}', space=vmem, size = 0x2000, scoped, tag = 'output window, operand 0, single buffered']
    #allocation3 [shape = 's32[1]{0}', space=sflag, size = 0x4, scoped, tag = 'scoped memory for bn_conv1d.1']
    %9 = vsyncpa [#allocation3], 0
    // Predicated region
    $region2: #{bn_conv1d.1} parent=1 // pred_check
      _
    $region3: #{bn_conv1d.1} parent=1 // pred_check_branch
      %11 = sbr.rel (0) target = $region5
    $region4: #{bn_conv1d.1} parent=1 // pred_region
      _
    $region5: #{bn_conv1d.1} parent=1 // pred_fallthru
      _
    // Predicated region
    $region6: #{bn_conv1d.1} parent=1 // pred_check
      _
    $region7: #{bn_conv1d.1} parent=1 // pred_check_branch
      %13 = sbr.rel (0) target = $region9
    $region8: #{bn_conv1d.1} parent=1 // pred_region
      _
    $region9: #{bn_conv1d.1} parent=1 // pred_fallthru
      _
    // Predicated region
    $region10: #{bn_conv1d.1} parent=1 // pred_check
      _
    $region11: #{bn_conv1d.1} parent=1 // pred_check_branch
      %15 = sbr.rel (0) target = $region13
    $region12: #{bn_conv1d.1} parent=1 // pred_region
      _
    $region13: #{bn_conv1d.1} parent=1 // pred_fallthru
      _
    // Predicated region
    $region14: #{bn_conv1d.1} parent=1 // pred_check
      _
    $region15: #{bn_conv1d.1} parent=1 // pred_check_branch
      %17 = sbr.rel (0) target = $region17
    $region16: #{bn_conv1d.1} parent=1 // pred_region
      _
    $region17: #{bn_conv1d.1} parent=1 // pred_fallthru
      _
    %v18 = vld [vmem:[%s0] sm:$0xf]
    %v19 = vld [vmem:[%s0 + $0x4] sm:$0xf]
    %22 = vrot.lane.b32.xlu0 %v18, 1
    %v23 = vpop.permute.xlu0 %22
    %24 = vrot.lane.b32.xlu0 %v19, 1
    %v25 = vpop.permute.xlu0 %24
    %vm28 = vcmask 7168
    %v29 = vsel %vm28, 0.0, %v23
    %v30 = vsel %vm28, 0.0, %v25
    %v31 = vsel %vm28, %v23, 0.0
    %v32 = vsel %vm28, %v25, 0.0
    %v35 = vrot.slane %v29, 4
    %v36 = vrot.slane %v31, 4
    %37 = vrot.lane.b32.xlu0 %v35, 127
    %v38 = vpop.permute.xlu0 %37
    %39 = vrot.lane.b32.xlu0 %v36, 127
    %v40 = vpop.permute.xlu0 %39
    %vm41 = vcmask 1039360
    %v42 = vsel %vm41, %v38, %v40
    %44 = vrot.lane.b32.xlu0 %v29, 126
    %v45 = vpop.permute.xlu0 %44
    %46 = vrot.lane.b32.xlu0 %v31, 126
    %v47 = vpop.permute.xlu0 %46
    %vm48 = vcmask 1031168
    %v49 = vsel %vm48, %v45, %v47
    %vm50 = vcmask 1043456
    %v51 = vsel %vm50, %v29, %v42
    %v54 = vrot.slane %v30, 4
    %v55 = vrot.slane %v32, 4
    %56 = vrot.lane.b32.xlu0 %v54, 127
    %v57 = vpop.permute.xlu0 %56
    %58 = vrot.lane.b32.xlu0 %v55, 127
    %v59 = vpop.permute.xlu0 %58
    %v60 = vsel %vm41, %v57, %v59
    %62 = vrot.lane.b32.xlu0 %v30, 126
    %v63 = vpop.permute.xlu0 %62
    %64 = vrot.lane.b32.xlu0 %v32, 126
    %v65 = vpop.permute.xlu0 %64
    %v66 = vsel %vm48, %v63, %v65
    %v67 = vsel %vm50, %v30, %v60
    %v68 = vld [vmem:[%s1] sm:$0xff]
    %vm69 = vcmask 97280
    %v71 = vsel %vm69, %v68, 0
    %v73 = vsel %vm50, %v49, 0
    %v75 = vsel %vm50, %v66, 0
    %77 = vmatprep.subr.mxu0 0.0
    %78 = vmatpush1.msra.mxu0 0.0
    %79 = vmatprep.subr.mxu0 0.0
    %80 = vmatpush1.msra.mxu0 0.0
    %81 = vmatprep.subr.mxu0 0.0
    %82 = vmatpush1.msra.mxu0 0.0
    %83 = vmatprep.subr.mxu0 0.0
    %84 = vmatpush1.msra.mxu0 0.0
    %85 = vmatprep.subr.mxu0 0.0
    %86 = vmatpush1.msra.mxu0 0.0
    %87 = vmatprep.subr.mxu0 0.0
    %88 = vmatpush1.msra.mxu0 0.0
    %89 = vmatprep.subr.mxu0 0.0
    %90 = vmatpush1.msra.mxu0 0.0
    %91 = vmatprep.subr.mxu0 0.0
    %92 = vmatpush1.msra.mxu0 0.0
    %93 = vmatprep.subr.mxu0 0.0
    %94 = vmatpush1.msra.mxu0 0.0
    %95 = vmatprep.subr.mxu0 0.0
    %96 = vmatpush1.msra.mxu0 0.0
    %97 = vmatprep.subr.mxu0 0.0
    %98 = vmatpush1.msra.mxu0 0.0
    %99 = vmatprep.subr.mxu0 0.0
    %100 = vmatpush1.msra.mxu0 0.0
    %101 = vmatprep.subr.mxu0 0.0
    %102 = vmatpush1.msra.mxu0 0.0
    %103 = vmatprep.subr.mxu0 0.0
    %104 = vmatpush1.msra.mxu0 0.0
    %105 = vmatprep.subr.mxu0 %v75
    %106 = vmatpush1.msra.mxu0 %v73
    %107 = vmatprep.subr.mxu0 %v67
    %108 = vmatpush1.msra.mxu0 %v51
    %109 = vmatprep.subr.mxu0 0.0
    %110 = vmatpush2.msra.mxu0 0.0
    %111 = vmatprep.subr.mxu0 0.0
    %112 = vmatpush2.msra.mxu0 0.0
    %113 = vmatprep.subr.mxu0 0.0
    %114 = vmatpush2.msra.mxu0 0.0
    %115 = vmatprep.subr.mxu0 0.0
    %116 = vmatpush2.msra.mxu0 0.0
    %117 = vmatprep.subr.mxu0 0.0
    %118 = vmatpush2.msra.mxu0 0.0
    %119 = vmatprep.subr.mxu0 0.0
    %120 = vmatpush2.msra.mxu0 0.0
    %121 = vmatprep.subr.mxu0 0.0
    %122 = vmatpush2.msra.mxu0 0.0
    %123 = vmatprep.subr.mxu0 0.0
    %124 = vmatpush2.msra.mxu0 0.0
    %125 = vmatprep.subr.mxu0 0.0
    %126 = vmatpush2.msra.mxu0 0.0
    %127 = vmatprep.subr.mxu0 0.0
    %128 = vmatpush2.msra.mxu0 0.0
    %129 = vmatprep.subr.mxu0 0.0
    %130 = vmatpush2.msra.mxu0 0.0
    %131 = vmatprep.subr.mxu0 0.0
    %132 = vmatpush2.msra.mxu0 0.0
    %133 = vmatprep.subr.mxu0 0.0
    %134 = vmatpush2.msra.mxu0 0.0
    %135 = vmatprep.subr.mxu0 0.0
    %136 = vmatpush2.msra.mxu0 0.0
    %137 = vmatprep.subr.mxu0 0.0
    %138 = vmatpush2.msra.mxu0 0.0
    %139 = vmatprep.subr.mxu0 0.0
    %140 = vmatpush2.msra.mxu0 0.0
    %141 = vmatprep.mubr.f32.mxu0 0.0
    %142 = vmatmul.mubr.f32.gmra.mxu0 %v71
    %v143 = vpop.f32.mrf.mxu0
    %v144 = vadd.f32 0.0, %v143
    %v145 = vpop.f32.mrf.mxu0
    %v146 = vadd.f32 0.0, %v145
    %147 = vdwg.mxu0
    %v148 = vld [vmem:[%s2] sm:$0xff]
    %v149 = vld [vmem:[%s3] sm:$0xff]
    %151 = vset.pattern.permute.xlu0 0
    %152 = vperm.xlu0 %151, %v148
    %v153 = vpop.permute.xlu0 %152
    %v155 = vmul.f32 %v144, %v153
    %v156 = vmul.f32 %v146, %v153
    %158 = vset.pattern.permute.xlu0 0
    %159 = vperm.xlu0 %158, %v149
    %v160 = vpop.permute.xlu0 %159
    %v162 = vadd.f32 %v155, %v160
    %v163 = vadd.f32 %v156, %v160
    %v164 = vmax.f32 %v162, 0.0
    %v165 = vmax.f32 %v163, 0.0
    %166 = vst [vmem:[#allocation2] sm:$0xff] %v164
    %s167 = scalar_lea.vmem [#allocation2], 8
    %168 = vst [vmem:[%s167] sm:$0xff] %v165
    // Predicated region
    $region18: #{bn_conv1d.1} parent=1 // pred_check
      _
    $region19: #{bn_conv1d.1} parent=1 // pred_check_branch
      %170 = sbr.rel (0) target = $region21
    $region20: #{bn_conv1d.1} parent=1 // pred_region
      %s172 = ssub.s32 256, 256
      %173 = vsyncadd [#allocation3], %s172
      %s174 = sshll.u32 [#allocation2], 4
      %s175 = int_to_ptr.vmem [resolvable:$true] %s174
      %180 = dma.vmem_to_hbm [thread:$0]  %s175, 256, %s4, [#allocation3], 128, 128, 8
    $region21: #{bn_conv1d.1} parent=1 // pred_fallthru
      _
    // Predicated region
    $region22: #{bn_conv1d.1} parent=1 // pred_check
      _
    $region23: #{bn_conv1d.1} parent=1 // pred_check_branch
      %182 = sbr.rel (0) target = $region25
    $region24: #{bn_conv1d.1} parent=1 // pred_region
      %183 = dma.done [#allocation3], 256
    $region25: #{bn_conv1d.1} parent=1 // pred_fallthru
      _
    %184 = vsyncpa [#allocation3], 1

</llo_original>
